<compile_context>
chip_gen: v5e
topology: v5e:2x2
jax: 0.10.0
libtpu: 0.0.40
codegen_flags: <defaults>
</compile_context>

<pallas_src>
import jax
import jax.numpy as jnp
from jax.experimental import pallas as pl
from jax.experimental.pallas import tpu as pltpu

N_GROUPS = 4
_VMEM_BUDGET = 20 << 20        # budget for the double-buffered blocks
_DEFAULT_TARGET_STEPS = 8      # ~8 grid steps; >= 4 so v7x megacore is used


def _vss_kernel(mask_ref, x_ref, o_ref):
    """One spatial tile.

    Block shapes are either
        mask_ref (C, T),      x_ref/o_ref (4*C, T)        [2-D fallback]
    or  mask_ref (C, S, 128), x_ref/o_ref (4*C, S, 128)   [vreg-aligned 3-D]
    The body is identical for both: the channel axis is axis 0.
    """
    c = mask_ref.shape[0]

    # _init_mask forward value: Phi = clamp(round(0.5*m + 0.5), 0, 1)
    # (jnp.round is half-to-even, matching torch.round). Computed once per tile.
    m = mask_ref[...].astype(jnp.float32)
    phi = jnp.clip(jnp.round(0.5 * m + 0.5), 0.0, 1.0)

    # mask_s with zeros replaced by 1; exact reciprocal hoisted out of the
    # 4-group loop (hidden under DMA in this memory-bound kernel).
    mask_s = jnp.sum(phi, axis=0, keepdims=True)
    mask_s = jnp.where(mask_s == 0.0, 1.0, mask_s)
    inv = pl.reciprocal(mask_s, approx=False)

    # 4 channel groups share phi / inv; static leading-axis slices are free
    # ref views (whole-vreg accesses in the 3-D layout).
    for g in range(N_GROUPS):
        xg = x_ref[g * c:(g + 1) * c].astype(jnp.float32)
        meas = jnp.sum(xg * phi, axis=0, keepdims=True)          # TimesPhix
        o_ref[g * c:(g + 1) * c] = ((meas * inv) * phi).astype(o_ref.dtype)  # TimesPhiT


def _choose_block(n_units, gran, bytes_per_unit, target_steps,
                  budget=_VMEM_BUDGET):
    """Block extent (in `gran`-granular units) along the tiled axis."""
    if n_units <= gran:
        return n_units                       # block == full extent (legal)
    blk = -(-n_units // target_steps)        # ceil(n / target_steps)
    blk = -(-blk // gran) * gran             # round up to the granularity
    cap = max(gran, (budget // (2 * bytes_per_unit)) // gran * gran)
    blk = min(blk, cap)
    if blk >= n_units:
        blk = n_units
    return blk


def _compiler_params(block_bytes):
    # Double-buffered blocks + headroom; matters on v5e (16 MiB default scoped
    # VMEM).  Capped well below v7x's 64 MiB physical VMEM per TC.
    vmem_limit = int(min(32 << 20, max(16 << 20, 2 * block_bytes + (4 << 20))))
    return pltpu.CompilerParams(dimension_semantics=("parallel",),
                                vmem_limit_bytes=vmem_limit)


def _run_3d(x2, m2, channels, n, target_steps):
    """Vreg-aligned path: n % 128 == 0, view spatial as (n//128, 128)."""
    ct = x2.shape[0]
    n128 = n // 128
    x3 = x2.reshape(ct, n128, 128)            # free (contiguous) reshape
    m3 = m2.reshape(channels, n128, 128)

    bpu = 128 * (2 * ct * x2.dtype.itemsize + channels * m2.dtype.itemsize)
    s = _choose_block(n128, 8, bpu, target_steps)
    grid = (pl.cdiv(n128, s),)                # ragged last block is fine

    out3 = pl.pallas_call(
        _vss_kernel,
        out_shape=jax.ShapeDtypeStruct((ct, n128, 128), x2.dtype),
        grid_spec=pltpu.PrefetchScalarGridSpec(
            num_scalar_prefetch=0,
            grid=grid,
            in_specs=[pl.BlockSpec((channels, s, 128), lambda t: (0, t, 0)),
                      pl.BlockSpec((ct, s, 128), lambda t: (0, t, 0))],
            out_specs=pl.BlockSpec((ct, s, 128), lambda t: (0, t, 0)),
        ),
        compiler_params=_compiler_params(s * bpu),
    )(m3, x3)
    return out3.reshape(ct, n)


def _run_2d(x2, m2, channels, n, target_steps):
    """Fallback: lane-tiled 2-D layout with a ragged last block (no padding)."""
    ct = x2.shape[0]
    bpu = 2 * ct * x2.dtype.itemsize + channels * m2.dtype.itemsize
    tile = _choose_block(n, 128, bpu, target_steps)
    grid = (pl.cdiv(n, tile),)                # ragged last block is fine

    out2 = pl.pallas_call(
        _vss_kernel,
        out_shape=jax.ShapeDtypeStruct((ct, n), x2.dtype),
        grid_spec=pltpu.PrefetchScalarGridSpec(
            num_scalar_prefetch=0,
            grid=grid,
            in_specs=[pl.BlockSpec((channels, tile), lambda t: (0, t)),
                      pl.BlockSpec((ct, tile), lambda t: (0, t))],
            out_specs=pl.BlockSpec((ct, tile), lambda t: (0, t)),
        ),
        compiler_params=_compiler_params(tile * bpu),
    )(m2, x2)
    return out2


def vss_forward(x_input, mask, channels, block=7, use_sampler=False,
                target_steps=_DEFAULT_TARGET_STEPS):
    """JAX/Pallas equivalent of VSS.forward (batch must be 1)."""
    # TODO(synk): Sampler / Reconstructor are external modules; not modeled.
    assert not use_sampler, "Sampler submodule is external; see TODO(synk)"
    del block
    B, CT, H, W = x_input.shape
    assert B == 1 and CT == N_GROUPS * channels
    assert mask.shape == (channels, H, W)

    n = H * W
    x2 = x_input.reshape(CT, n)               # free reshapes, no copies
    m2 = mask.reshape(channels, n)

    if n % 128 == 0:
        out2 = _run_3d(x2, m2, channels, n, target_steps)
    else:
        out2 = _run_2d(x2, m2, channels, n, target_steps)

    # torch.cat(x_out, dim=1) is realized by the channel layout of out2.
    return out2.reshape(B, CT, H, W)


def _reference(x_input, mask, channels):
    """Pure-JAX reference for the same computation (sanity check)."""
    B, CT, H, W = x_input.shape
    x = x_input.astype(jnp.float32).reshape(N_GROUPS, channels, H, W)
    phi = jnp.clip(jnp.round(0.5 * mask.astype(jnp.float32) + 0.5), 0.0, 1.0)
    meas = jnp.sum(x * phi[None], axis=1)                    # (4, H, W)
    mask_s = jnp.sum(phi, axis=0)
    mask_s = jnp.where(mask_s == 0.0, 1.0, mask_s)
    meas_re = meas / mask_s
    out = meas_re[:, None] * phi[None]                       # (4, C, H, W)
    return out.reshape(B, CT, H, W)


if __name__ == "__main__":
    key = jax.random.PRNGKey(0)
    k_mask, k_xa, k_xb = jax.random.split(key, 3)

    channels = 4                      # mask frames (original: 4)
    B = 1                             # squeeze/unsqueeze pattern => batch 1
    CT = N_GROUPS * channels

    # Case A: H*W multiple of 128 -> vreg-aligned 3-D path, multi-step ragged
    # grid (48*48 = 2304 = 18 rows of 128 lanes; S=8 -> 3 grid steps).
    Ha = Wa = 48
    std_a = (2.0 / (Ha * Wa)) ** 0.5  # kaiming_normal_ std: sqrt(2 / (H*W))
    mask_a = jax.random.normal(k_mask, (channels, Ha, Wa), jnp.float32) * std_a
    x_a = jax.random.normal(k_xa, (B, CT, Ha, Wa), jnp.float32)

    out_a = jax.block_until_ready(
        vss_forward(x_a, mask_a, channels, block=7, use_sampler=False))
    ref_a = _reference(x_a, mask_a, channels)
    assert out_a.shape == (B, CT, Ha, Wa)
    assert jnp.allclose(out_a, ref_a, atol=1e-5, rtol=1e-5)

    # Case B: H*W NOT a multiple of 128 (like the original 264x264) -> 2-D
    # fallback path with a ragged last block; still no padding or slicing.
    Hb = Wb = 18
    std_b = (2.0 / (Hb * Wb)) ** 0.5
    mask_b = jax.random.normal(k_mask, (channels, Hb, Wb), jnp.float32) * std_b
    x_b = jax.random.normal(k_xb, (B, CT, Hb, Wb), jnp.float32)

    out_b = jax.block_until_ready(
        vss_forward(x_b, mask_b, channels, block=7, use_sampler=False))
    ref_b = _reference(x_b, mask_b, channels)
    assert out_b.shape == (B, CT, Hb, Wb)
    assert jnp.allclose(out_b, ref_b, atol=1e-5, rtol=1e-5)

    # Case C: bf16 activations / output (f32 math inside the kernel); loose
    # tolerance only covers the final bf16 output cast.
    x_a_bf16 = x_a.astype(jnp.bfloat16)
    out_bf = jax.block_until_ready(
        vss_forward(x_a_bf16, mask_a, channels, block=7, use_sampler=False))
    ref_bf = _reference(x_a_bf16.astype(jnp.float32), mask_a, channels)
    assert out_bf.dtype == jnp.bfloat16
    assert jnp.allclose(out_bf.astype(jnp.float32), ref_bf,
                        atol=5e-2, rtol=5e-2)

    print("KERNEL_OK")
</pallas_src>

<mosaic_0001>
module attributes {stable_mosaic.version = 11 : i64} {
  func.func @_vss_kernel(%arg0: i32, %arg1: memref<4x8x128xf32, #tpu.memory_space<vmem>>, %arg2: memref<16x8x128xf32, #tpu.memory_space<vmem>>, %arg3: memref<16x8x128xf32, #tpu.memory_space<vmem>>) attributes {dimension_semantics = [#tpu.dimension_semantics<parallel>], iteration_bounds = array<i64: 3>, scalar_prefetch = 0 : i64, scratch_operands = 0 : i64, tpu.core_type = #tpu.core_type<tc>, window_params = [{transform_indices = @transform_0, window_bounds = array<i64: 4, 8, 128>}, {transform_indices = @transform_1, window_bounds = array<i64: 16, 8, 128>}, {transform_indices = @transform_2, window_bounds = array<i64: 16, 8, 128>}]} {
    %c0 = arith.constant 0 : index
    %c0_0 = arith.constant 0 : index
    %c0_1 = arith.constant 0 : index
    %0 = vector.load %arg1[%c0, %c0_0, %c0_1] : memref<4x8x128xf32, #tpu.memory_space<vmem>>, vector<4x8x128xf32>
    %cst = arith.constant 5.000000e-01 : f32
    %1 = vector.broadcast %cst : f32 to vector<4x8x128xf32>
    %2 = arith.mulf %1, %0 : vector<4x8x128xf32>
    %cst_2 = arith.constant 5.000000e-01 : f32
    %3 = vector.broadcast %cst_2 : f32 to vector<4x8x128xf32>
    %4 = arith.addf %2, %3 : vector<4x8x128xf32>
    %5 = math.roundeven %4 : vector<4x8x128xf32>
    %cst_3 = arith.constant 0.000000e+00 : f32
    %cst_4 = arith.constant 1.000000e+00 : f32
    %6 = vector.broadcast %cst_3 : f32 to vector<4x8x128xf32>
    %7 = arith.maximumf %6, %5 : vector<4x8x128xf32>
    %8 = vector.broadcast %cst_4 : f32 to vector<4x8x128xf32>
    %9 = arith.minimumf %8, %7 : vector<4x8x128xf32>
    %cst_5 = arith.constant dense<0.000000e+00> : vector<8x128xf32>
    %10 = vector.multi_reduction <add>, %9, %cst_5 [0] : vector<4x8x128xf32> to vector<8x128xf32>
    %11 = vector.shape_cast %10 : vector<8x128xf32> to vector<1x8x128xf32>
    %cst_6 = arith.constant 0.000000e+00 : f32
    %12 = vector.broadcast %cst_6 : f32 to vector<1x8x128xf32>
    %13 = arith.cmpf oeq, %11, %12 : vector<1x8x128xf32>
    %cst_7 = arith.constant 1.000000e+00 : f32
    %14 = vector.broadcast %cst_7 : f32 to vector<1x8x128xf32>
    %15 = arith.select %13, %14, %11 : vector<1x8x128xi1>, vector<1x8x128xf32>
    %16 = tpu.reciprocal %15 : vector<1x8x128xf32> -> vector<1x8x128xf32>
    %c0_8 = arith.constant 0 : index
    %c0_9 = arith.constant 0 : index
    %c0_10 = arith.constant 0 : index
    %17 = vector.load %arg2[%c0_8, %c0_9, %c0_10] : memref<16x8x128xf32, #tpu.memory_space<vmem>>, vector<4x8x128xf32>
    %18 = arith.mulf %17, %9 : vector<4x8x128xf32>
    %cst_11 = arith.constant dense<0.000000e+00> : vector<8x128xf32>
    %19 = vector.multi_reduction <add>, %18, %cst_11 [0] : vector<4x8x128xf32> to vector<8x128xf32>
    %20 = vector.shape_cast %19 : vector<8x128xf32> to vector<1x8x128xf32>
    %21 = arith.mulf %20, %16 : vector<1x8x128xf32>
    %22 = vector.broadcast %21 : vector<1x8x128xf32> to vector<4x8x128xf32>
    %23 = arith.mulf %22, %9 : vector<4x8x128xf32>
    %c0_12 = arith.constant 0 : index
    %c0_13 = arith.constant 0 : index
    %c0_14 = arith.constant 0 : index
    %24 = vector.load %arg3[%c0_12, %c0_13, %c0_14] : memref<16x8x128xf32, #tpu.memory_space<vmem>>, vector<4x8x128xf32>
    tpu.vector_store %arg3[%c0_12, %c0_13, %c0_14], %23 {strides = array<i32>} : memref<16x8x128xf32, #tpu.memory_space<vmem>>, vector<4x8x128xf32>,
    %c4 = arith.constant 4 : index
    %c0_15 = arith.constant 0 : index
    %c0_16 = arith.constant 0 : index
    %25 = vector.load %arg2[%c4, %c0_15, %c0_16] : memref<16x8x128xf32, #tpu.memory_space<vmem>>, vector<4x8x128xf32>
    %26 = arith.mulf %25, %9 : vector<4x8x128xf32>
    %cst_17 = arith.constant dense<0.000000e+00> : vector<8x128xf32>
    %27 = vector.multi_reduction <add>, %26, %cst_17 [0] : vector<4x8x128xf32> to vector<8x128xf32>
    %28 = vector.shape_cast %27 : vector<8x128xf32> to vector<1x8x128xf32>
    %29 = arith.mulf %28, %16 : vector<1x8x128xf32>
    %30 = vector.broadcast %29 : vector<1x8x128xf32> to vector<4x8x128xf32>
    %31 = arith.mulf %30, %9 : vector<4x8x128xf32>
    %c4_18 = arith.constant 4 : index
    %c0_19 = arith.constant 0 : index
    %c0_20 = arith.constant 0 : index
    %32 = vector.load %arg3[%c4_18, %c0_19, %c0_20] : memref<16x8x128xf32, #tpu.memory_space<vmem>>, vector<4x8x128xf32>
    tpu.vector_store %arg3[%c4_18, %c0_19, %c0_20], %31 {strides = array<i32>} : memref<16x8x128xf32, #tpu.memory_space<vmem>>, vector<4x8x128xf32>,
    %c8 = arith.constant 8 : index
    %c0_21 = arith.constant 0 : index
    %c0_22 = arith.constant 0 : index
    %33 = vector.load %arg2[%c8, %c0_21, %c0_22] : memref<16x8x128xf32, #tpu.memory_space<vmem>>, vector<4x8x128xf32>
    %34 = arith.mulf %33, %9 : vector<4x8x128xf32>
    %cst_23 = arith.constant dense<0.000000e+00> : vector<8x128xf32>
    %35 = vector.multi_reduction <add>, %34, %cst_23 [0] : vector<4x8x128xf32> to vector<8x128xf32>
    %36 = vector.shape_cast %35 : vector<8x128xf32> to vector<1x8x128xf32>
    %37 = arith.mulf %36, %16 : vector<1x8x128xf32>
    %38 = vector.broadcast %37 : vector<1x8x128xf32> to vector<4x8x128xf32>
    %39 = arith.mulf %38, %9 : vector<4x8x128xf32>
    %c8_24 = arith.constant 8 : index
    %c0_25 = arith.constant 0 : index
    %c0_26 = arith.constant 0 : index
    %40 = vector.load %arg3[%c8_24, %c0_25, %c0_26] : memref<16x8x128xf32, #tpu.memory_space<vmem>>, vector<4x8x128xf32>
    tpu.vector_store %arg3[%c8_24, %c0_25, %c0_26], %39 {strides = array<i32>} : memref<16x8x128xf32, #tpu.memory_space<vmem>>, vector<4x8x128xf32>,
    %c12 = arith.constant 12 : index
    %c0_27 = arith.constant 0 : index
    %c0_28 = arith.constant 0 : index
    %41 = vector.load %arg2[%c12, %c0_27, %c0_28] : memref<16x8x128xf32, #tpu.memory_space<vmem>>, vector<4x8x128xf32>
    %42 = arith.mulf %41, %9 : vector<4x8x128xf32>
    %cst_29 = arith.constant dense<0.000000e+00> : vector<8x128xf32>
    %43 = vector.multi_reduction <add>, %42, %cst_29 [0] : vector<4x8x128xf32> to vector<8x128xf32>
    %44 = vector.shape_cast %43 : vector<8x128xf32> to vector<1x8x128xf32>
    %45 = arith.mulf %44, %16 : vector<1x8x128xf32>
    %46 = vector.broadcast %45 : vector<1x8x128xf32> to vector<4x8x128xf32>
    %47 = arith.mulf %46, %9 : vector<4x8x128xf32>
    %c12_30 = arith.constant 12 : index
    %c0_31 = arith.constant 0 : index
    %c0_32 = arith.constant 0 : index
    %48 = vector.load %arg3[%c12_30, %c0_31, %c0_32] : memref<16x8x128xf32, #tpu.memory_space<vmem>>, vector<4x8x128xf32>
    tpu.vector_store %arg3[%c12_30, %c0_31, %c0_32], %47 {strides = array<i32>} : memref<16x8x128xf32, #tpu.memory_space<vmem>>, vector<4x8x128xf32>,
    return
  }
  func.func @transform_0(%arg0: i32) -> (i32, i32, i32) {
    %c0_i32 = arith.constant 0 : i32
    %c0_i32_0 = arith.constant 0 : i32
    %c0_i32_1 = arith.constant 0 : i32
    return %c0_i32, %arg0, %c0_i32_0 : i32, i32, i32
  }
  func.func @transform_1(%arg0: i32) -> (i32, i32, i32) {
    %c0_i32 = arith.constant 0 : i32
    %c0_i32_0 = arith.constant 0 : i32
    %c0_i32_1 = arith.constant 0 : i32
    return %c0_i32, %arg0, %c0_i32_0 : i32, i32, i32
  }
  func.func @transform_2(%arg0: i32) -> (i32, i32, i32) {
    %c0_i32 = arith.constant 0 : i32
    %c0_i32_0 = arith.constant 0 : i32
    %c0_i32_1 = arith.constant 0 : i32
    return %c0_i32, %arg0, %c0_i32_0 : i32, i32, i32
  }
}

</mosaic_0001>

<llo_original>
// kernel: tpu_custom_call.1
$region0: #{tpu_custom_call.1}
  #allocation0 [shape = 'u32[]', space=smem, size = 0x4, offset = 0x4, fixed_abs, tag = 'smem constant byte address 0x4 - core index']
  #allocation1 [shape = 'u32[72,128]{1,0:T(1,128)}', space=vmem, size = 0x9000, scoped, tag = 'internal scratch']
  %s0 = inlined_call_operand.vmem [shape: f32[4,18,128], index: 0, kind: input, shape index: {}]
  %s1 = inlined_call_operand.vmem [shape: f32[16,18,128], index: 1, kind: input, shape index: {}]
  %s2 = inlined_call_operand.vmem [shape: f32[16,18,128], index: 2, kind: output, shape index: {}]
  %s3 = sld [smem:[#allocation0]]
  $region151: #{tpu_custom_call.1} parent=0
    _
  %s5 = ssub.s32 1, %s3
  %s6 = scalar_select 0, %s5, %s3
  $region1: #{tpu_custom_call.1} parent=0
    #allocation2 [shape = 'u8[32768]{0}', space=vmem, size = 0x8000, scoped, tag = 'input window, operand 0']
    #allocation3 [shape = 'u8[131072]{0}', space=vmem, size = 0x20000, scoped, tag = 'input window, operand 1']
    #allocation4 [shape = 'u8[131072]{0}', space=vmem, size = 0x20000, scoped, tag = 'output window, operand 0']
    loop: start=0, step=1, limit=5
    $region2: #{tpu_custom_call.1} parent=1 // loop_pre_header
      _
    $region3: #{tpu_custom_call.1} parent=1 // loop_header
      %s8 = sphi 0, %s12
      %p9 = scmp.ge.s32.totalorder %s8, 5
      %s18 = sphi 0, %s20
      %s21 = sphi 0, %s18
      %s22 = sphi 0, %s21
      %s38 = sphi 0, %s22
      %s44 = sphi 0, %s46
      %s47 = sphi 0, %s44
      %s48 = sphi 0, %s47
      %s64 = sphi 0, %s48
      %s70 = sphi 0, %s72
      %s73 = sphi 0, %s70
      %s74 = sphi 0, %s73
      %s90 = sphi 0, %s74
    $region4: #{tpu_custom_call.1} parent=1 // loop_header_branch
      %11 = sbr.rel (%p9) target = $region8
    $region5: #{tpu_custom_call.1} parent=1 // loop_body
      %s13 = ssub.s32 %s8, 1
      %s14 = ssub.s32 %s8, 2
      %s15 = sadd.s32 %s8, 1
      %s16 = ssub.s32 %s8, %s15
      %p17 = scmp.eq.s32.totalorder %s16, 0
      %s19 = sadd.s32 %s18, 1
      %s20 = scalar_select %p17, %s18, %s19
      %p23 = pneg %p17
      %p24 = scmp.eq.s32.totalorder %s8, 2
      %p25 = por %p23, %p24
      %p26 = scmp.ne.s32.totalorder %s18, %s21
      %p27 = scmp.eq.s32.totalorder %s8, 0
      %p28 = por %p26, %p27
      %p29 = scmp.ne.s32.totalorder %s18, %s21
      %p30 = scmp.eq.s32.totalorder %s13, 2
      %p31 = por %p29, %p30
      %p32 = scmp.ne.s32.totalorder %s21, %s22
      %p33 = scmp.eq.s32.totalorder %s13, 0
      %p34 = por %p32, %p33
      %p35 = scmp.ne.s32.totalorder %s21, %s22
      %p36 = scmp.eq.s32.totalorder %s14, 2
      %p37 = por %p35, %p36
      %p39 = scmp.ne.s32.totalorder %s22, %s38
      %p40 = scmp.eq.s32.totalorder %s14, 0
      %p41 = por %p39, %p40
      %s42 = ssub.s32 %s8, %s15
      %p43 = scmp.eq.s32.totalorder %s42, 0
      %s45 = sadd.s32 %s44, 1
      %s46 = scalar_select %p43, %s44, %s45
      %p49 = pneg %p43
      %p50 = scmp.eq.s32.totalorder %s8, 2
      %p51 = por %p49, %p50
      %p52 = scmp.ne.s32.totalorder %s44, %s47
      %p53 = scmp.eq.s32.totalorder %s8, 0
      %p54 = por %p52, %p53
      %p55 = scmp.ne.s32.totalorder %s44, %s47
      %p56 = scmp.eq.s32.totalorder %s13, 2
      %p57 = por %p55, %p56
      %p58 = scmp.ne.s32.totalorder %s47, %s48
      %p59 = scmp.eq.s32.totalorder %s13, 0
      %p60 = por %p58, %p59
      %p61 = scmp.ne.s32.totalorder %s47, %s48
      %p62 = scmp.eq.s32.totalorder %s14, 2
      %p63 = por %p61, %p62
      %p65 = scmp.ne.s32.totalorder %s48, %s64
      %p66 = scmp.eq.s32.totalorder %s14, 0
      %p67 = por %p65, %p66
      %s68 = ssub.s32 %s8, %s15
      %p69 = scmp.eq.s32.totalorder %s68, 0
      %s71 = sadd.s32 %s70, 1
      %s72 = scalar_select %p69, %s70, %s71
      %p75 = pneg %p69
      %p76 = scmp.eq.s32.totalorder %s8, 2
      %p77 = por %p75, %p76
      %p78 = scmp.ne.s32.totalorder %s70, %s73
      %p79 = scmp.eq.s32.totalorder %s8, 0
      %p80 = por %p78, %p79
      %p81 = scmp.ne.s32.totalorder %s70, %s73
      %p82 = scmp.eq.s32.totalorder %s13, 2
      %p83 = por %p81, %p82
      %p84 = scmp.ne.s32.totalorder %s73, %s74
      %p85 = scmp.eq.s32.totalorder %s13, 0
      %p86 = por %p84, %p85
      %p87 = scmp.ne.s32.totalorder %s73, %s74
      %p88 = scmp.eq.s32.totalorder %s14, 2
      %p89 = por %p87, %p88
      %p91 = scmp.ne.s32.totalorder %s74, %s90
      %p92 = scmp.eq.s32.totalorder %s14, 0
      %p93 = por %p91, %p92
      %p94 = scmp.le.s32.totalorder 1, %s8
      %p95 = scmp.lt.s32.totalorder %s8, 4
      %p96 = pnand %p94, %p95
      %p97 = pneg %p96
      // Predicated region
      $region9: #{tpu_custom_call.1} parent=5 // pred_check
        _
      $region10: #{tpu_custom_call.1} parent=5 // pred_check_branch
        %99 = sbr.rel (%p96) target = $region12
      $region11: #{tpu_custom_call.1} parent=5 // pred_region
        %s100 = ssub.s32 %s8, 1
      $region12: #{tpu_custom_call.1} parent=5 // pred_fallthru
        _
      %p101 = scmp.lt.s32.totalorder %s8, 3
      // Predicated region
      $region13: #{tpu_custom_call.1} parent=5 // pred_check
        %p102 = pneg %p101
      $region14: #{tpu_custom_call.1} parent=5 // pred_check_branch
        %104 = sbr.rel (%p102) target = $region16
      $region15: #{tpu_custom_call.1} parent=5 // pred_region
        // Predicated region
        $region17: #{tpu_custom_call.1} parent=15 // pred_check
          %p105 = pneg %p28
        $region18: #{tpu_custom_call.1} parent=15 // pred_check_branch
          %107 = sbr.rel (%p105) target = $region20
        $region19: #{tpu_custom_call.1} parent=15 // pred_region
          %s108 = sand.u32 %s18, 1
          %s109 = sand.u32 %s18, 1
          %s110 = smul.addr %s109, 32
          %s111 = scalar_lea.vmem [#allocation2], %s110
          %s112 = smul.addr %s8, 8
          %s113 = scalar_lea.vmem %s0, %s112
          // Predicated region
          $region21: #{tpu_custom_call.1} parent=19 // pred_check
            _
          $region22: #{tpu_custom_call.1} parent=19 // pred_check_branch
            %115 = sbr.rel (0) target = $region24
          $region23: #{tpu_custom_call.1} parent=19 // pred_region
            // Predicated region
            $region25: #{tpu_custom_call.1} parent=23 // pred_check
              _
            $region26: #{tpu_custom_call.1} parent=23 // pred_check_branch
              %117 = sbr.rel (0) target = $region28
            $region27: #{tpu_custom_call.1} parent=23 // pred_region
              // Predicated region
              $region40: #{tpu_custom_call.1} parent=27 // pred_check
                _
              $region41: #{tpu_custom_call.1} parent=27 // pred_check_branch
                %139 = sbr.rel (0) target = $region43
              $region42: #{tpu_custom_call.1} parent=27 // pred_region
                loop: start=0, step=1, limit=1
                $region44: #{tpu_custom_call.1} parent=42 // loop_pre_header
                  _
                $region45: #{tpu_custom_call.1} parent=42 // loop_header
                  %s141 = sphi 0, %s145
                  %p142 = scmp.ge.s32.totalorder %s141, 1
                  %s146 = sphi %s113, %s113
                  %s147 = sphi %s111, %s111
                $region46: #{tpu_custom_call.1} parent=42 // loop_header_branch
                  %144 = sbr.rel (%p142) target = $region50
                $region47: #{tpu_custom_call.1} parent=42 // loop_body
                  %v148 = vld [vmem:[%s146] sm:$0xff]
                  %149 = vst [vmem:[%s147] sm:$0xff] %v148
                  %v150 = vld [vmem:[%s146 + $0x18] sm:$0xff]
                  %151 = vst [vmem:[%s147 + $0x8] sm:$0xff] %v150
                  %v152 = vld [vmem:[%s146 + $0x30] sm:$0xff]
                  %153 = vst [vmem:[%s147 + $0x10] sm:$0xff] %v152
                  %v154 = vld [vmem:[%s146 + $0x48] sm:$0xff]
                  %155 = vst [vmem:[%s147 + $0x18] sm:$0xff] %v154
                $region48: #{tpu_custom_call.1} parent=42 // loop_footer
                  %s145 = sadd.s32 1, %s141
                $region49: #{tpu_custom_call.1} parent=42 // loop_footer_branch
                  %140 = sbr.rel target = $region45
                $region50: #{tpu_custom_call.1} parent=42 // loop_exit
                  _
              $region43: #{tpu_custom_call.1} parent=27 // pred_fallthru
                _
              // Predicated region
              $region51: #{tpu_custom_call.1} parent=27 // pred_check
                _
              $region52: #{tpu_custom_call.1} parent=27 // pred_check_branch
                %157 = sbr.rel target = $region54
              $region53: #{tpu_custom_call.1} parent=27 // pred_region
                _
              $region54: #{tpu_custom_call.1} parent=27 // pred_fallthru
                _
            $region28: #{tpu_custom_call.1} parent=23 // pred_fallthru
              _
            // Predicated region
            $region29: #{tpu_custom_call.1} parent=23 // pred_check
              _
            $region30: #{tpu_custom_call.1} parent=23 // pred_check_branch
              %119 = sbr.rel target = $region32
            $region31: #{tpu_custom_call.1} parent=23 // pred_region
              %s121 = ssub.s32 256, 1
              loop: start=0, step=1, limit=1
              $region33: #{tpu_custom_call.1} parent=31 // loop_pre_header
                _
              $region34: #{tpu_custom_call.1} parent=31 // loop_header
                %s123 = sphi 0, %s127
                %p124 = scmp.ge.s32.totalorder %s123, 1
                %s128 = sphi %s113, %s113
                %s129 = sphi %s111, %s111
              $region35: #{tpu_custom_call.1} parent=31 // loop_header_branch
                %126 = sbr.rel (%p124) target = $region39
              $region36: #{tpu_custom_call.1} parent=31 // loop_body
                %v130 = vld [vmem:[%s128] sm:%s121]
                %131 = vst [vmem:[%s129] sm:%s121] %v130
                %v132 = vld [vmem:[%s128 + $0x18] sm:%s121]
                %133 = vst [vmem:[%s129 + $0x8] sm:%s121] %v132
                %v134 = vld [vmem:[%s128 + $0x30] sm:%s121]
                %135 = vst [vmem:[%s129 + $0x10] sm:%s121] %v134
                %v136 = vld [vmem:[%s128 + $0x48] sm:%s121]
                %137 = vst [vmem:[%s129 + $0x18] sm:%s121] %v136
              $region37: #{tpu_custom_call.1} parent=31 // loop_footer
                %s127 = sadd.s32 1, %s123
              $region38: #{tpu_custom_call.1} parent=31 // loop_footer_branch
                %122 = sbr.rel target = $region34
              $region39: #{tpu_custom_call.1} parent=31 // loop_exit
                _
            $region32: #{tpu_custom_call.1} parent=23 // pred_fallthru
              _
          $region24: #{tpu_custom_call.1} parent=19 // pred_fallthru
            _
          %158 = vnop
        $region20: #{tpu_custom_call.1} parent=15 // pred_fallthru
          _
        // Predicated region
        $region55: #{tpu_custom_call.1} parent=15 // pred_check
          %p159 = pneg %p54
        $region56: #{tpu_custom_call.1} parent=15 // pred_check_branch
          %161 = sbr.rel (%p159) target = $region58
        $region57: #{tpu_custom_call.1} parent=15 // pred_region
          %s162 = sand.u32 %s44, 1
          %s163 = sand.u32 %s44, 1
          %s164 = smul.addr %s163, 128
          %s165 = scalar_lea.vmem [#allocation3], %s164
          %s166 = smul.addr %s8, 8
          %s167 = scalar_lea.vmem %s1, %s166
          // Predicated region
          $region59: #{tpu_custom_call.1} parent=57 // pred_check
            _
          $region60: #{tpu_custom_call.1} parent=57 // pred_check_branch
            %169 = sbr.rel (0) target = $region62
          $region61: #{tpu_custom_call.1} parent=57 // pred_region
            // Predicated region
            $region63: #{tpu_custom_call.1} parent=61 // pred_check
              _
            $region64: #{tpu_custom_call.1} parent=61 // pred_check_branch
              %171 = sbr.rel (0) target = $region66
            $region65: #{tpu_custom_call.1} parent=61 // pred_region
              // Predicated region
              $region78: #{tpu_custom_call.1} parent=65 // pred_check
                _
              $region79: #{tpu_custom_call.1} parent=65 // pred_check_branch
                %217 = sbr.rel (0) target = $region81
              $region80: #{tpu_custom_call.1} parent=65 // pred_region
                loop: start=0, step=1, limit=1
                $region82: #{tpu_custom_call.1} parent=80 // loop_pre_header
                  _
                $region83: #{tpu_custom_call.1} parent=80 // loop_header
                  %s219 = sphi 0, %s223
                  %p220 = scmp.ge.s32.totalorder %s219, 1
                  %s224 = sphi %s167, %s167
                  %s225 = sphi %s165, %s165
                $region84: #{tpu_custom_call.1} parent=80 // loop_header_branch
                  %222 = sbr.rel (%p220) target = $region88
                $region85: #{tpu_custom_call.1} parent=80 // loop_body
                  %v226 = vld [vmem:[%s224] sm:$0xff]
                  %227 = vst [vmem:[%s225] sm:$0xff] %v226
                  %v228 = vld [vmem:[%s224 + $0x18] sm:$0xff]
                  %229 = vst [vmem:[%s225 + $0x8] sm:$0xff] %v228
                  %v230 = vld [vmem:[%s224 + $0x30] sm:$0xff]
                  %231 = vst [vmem:[%s225 + $0x10] sm:$0xff] %v230
                  %v232 = vld [vmem:[%s224 + $0x48] sm:$0xff]
                  %233 = vst [vmem:[%s225 + $0x18] sm:$0xff] %v232
                  %v234 = vld [vmem:[%s224 + $0x60] sm:$0xff]
                  %235 = vst [vmem:[%s225 + $0x20] sm:$0xff] %v234
                  %v236 = vld [vmem:[%s224 + $0x78] sm:$0xff]
                  %237 = vst [vmem:[%s225 + $0x28] sm:$0xff] %v236
                  %v238 = vld [vmem:[%s224 + $0x90] sm:$0xff]
                  %239 = vst [vmem:[%s225 + $0x30] sm:$0xff] %v238
                  %v240 = vld [vmem:[%s224 + $0xa8] sm:$0xff]
                  %241 = vst [vmem:[%s225 + $0x38] sm:$0xff] %v240
                  %v242 = vld [vmem:[%s224 + $0xc0] sm:$0xff]
                  %243 = vst [vmem:[%s225 + $0x40] sm:$0xff] %v242
                  %v244 = vld [vmem:[%s224 + $0xd8] sm:$0xff]
                  %245 = vst [vmem:[%s225 + $0x48] sm:$0xff] %v244
                  %v246 = vld [vmem:[%s224 + $0xf0] sm:$0xff]
                  %247 = vst [vmem:[%s225 + $0x50] sm:$0xff] %v246
                  %v248 = vld [vmem:[%s224 + $0x108] sm:$0xff]
                  %249 = vst [vmem:[%s225 + $0x58] sm:$0xff] %v248
                  %v250 = vld [vmem:[%s224 + $0x120] sm:$0xff]
                  %251 = vst [vmem:[%s225 + $0x60] sm:$0xff] %v250
                  %v252 = vld [vmem:[%s224 + $0x138] sm:$0xff]
                  %253 = vst [vmem:[%s225 + $0x68] sm:$0xff] %v252
                  %v254 = vld [vmem:[%s224 + $0x150] sm:$0xff]
                  %255 = vst [vmem:[%s225 + $0x70] sm:$0xff] %v254
                  %v256 = vld [vmem:[%s224 + $0x168] sm:$0xff]
                  %257 = vst [vmem:[%s225 + $0x78] sm:$0xff] %v256
                $region86: #{tpu_custom_call.1} parent=80 // loop_footer
                  %s223 = sadd.s32 1, %s219
                $region87: #{tpu_custom_call.1} parent=80 // loop_footer_branch
                  %218 = sbr.rel target = $region83
                $region88: #{tpu_custom_call.1} parent=80 // loop_exit
                  _
              $region81: #{tpu_custom_call.1} parent=65 // pred_fallthru
                _
              // Predicated region
              $region89: #{tpu_custom_call.1} parent=65 // pred_check
                _
              $region90: #{tpu_custom_call.1} parent=65 // pred_check_branch
                %259 = sbr.rel target = $region92
              $region91: #{tpu_custom_call.1} parent=65 // pred_region
                _
              $region92: #{tpu_custom_call.1} parent=65 // pred_fallthru
                _
            $region66: #{tpu_custom_call.1} parent=61 // pred_fallthru
              _
            // Predicated region
            $region67: #{tpu_custom_call.1} parent=61 // pred_check
              _
            $region68: #{tpu_custom_call.1} parent=61 // pred_check_branch
              %173 = sbr.rel target = $region70
            $region69: #{tpu_custom_call.1} parent=61 // pred_region
              %s175 = ssub.s32 256, 1
              loop: start=0, step=1, limit=1
              $region71: #{tpu_custom_call.1} parent=69 // loop_pre_header
                _
              $region72: #{tpu_custom_call.1} parent=69 // loop_header
                %s177 = sphi 0, %s181
                %p178 = scmp.ge.s32.totalorder %s177, 1
                %s182 = sphi %s167, %s167
                %s183 = sphi %s165, %s165
              $region73: #{tpu_custom_call.1} parent=69 // loop_header_branch
                %180 = sbr.rel (%p178) target = $region77
              $region74: #{tpu_custom_call.1} parent=69 // loop_body
                %v184 = vld [vmem:[%s182] sm:%s175]
                %185 = vst [vmem:[%s183] sm:%s175] %v184
                %v186 = vld [vmem:[%s182 + $0x18] sm:%s175]
                %187 = vst [vmem:[%s183 + $0x8] sm:%s175] %v186
                %v188 = vld [vmem:[%s182 + $0x30] sm:%s175]
                %189 = vst [vmem:[%s183 + $0x10] sm:%s175] %v188
                %v190 = vld [vmem:[%s182 + $0x48] sm:%s175]
                %191 = vst [vmem:[%s183 + $0x18] sm:%s175] %v190
                %v192 = vld [vmem:[%s182 + $0x60] sm:%s175]
                %193 = vst [vmem:[%s183 + $0x20] sm:%s175] %v192
                %v194 = vld [vmem:[%s182 + $0x78] sm:%s175]
                %195 = vst [vmem:[%s183 + $0x28] sm:%s175] %v194
                %v196 = vld [vmem:[%s182 + $0x90] sm:%s175]
                %197 = vst [vmem:[%s183 + $0x30] sm:%s175] %v196
                %v198 = vld [vmem:[%s182 + $0xa8] sm:%s175]
                %199 = vst [vmem:[%s183 + $0x38] sm:%s175] %v198
                %v200 = vld [vmem:[%s182 + $0xc0] sm:%s175]
                %201 = vst [vmem:[%s183 + $0x40] sm:%s175] %v200
                %v202 = vld [vmem:[%s182 + $0xd8] sm:%s175]
                %203 = vst [vmem:[%s183 + $0x48] sm:%s175] %v202
                %v204 = vld [vmem:[%s182 + $0xf0] sm:%s175]
                %205 = vst [vmem:[%s183 + $0x50] sm:%s175] %v204
                %v206 = vld [vmem:[%s182 + $0x108] sm:%s175]
                %207 = vst [vmem:[%s183 + $0x58] sm:%s175] %v206
                %v208 = vld [vmem:[%s182 + $0x120] sm:%s175]
                %209 = vst [vmem:[%s183 + $0x60] sm:%s175] %v208
                %v210 = vld [vmem:[%s182 + $0x138] sm:%s175]
                %211 = vst [vmem:[%s183 + $0x68] sm:%s175] %v210
                %v212 = vld [vmem:[%s182 + $0x150] sm:%s175]
                %213 = vst [vmem:[%s183 + $0x70] sm:%s175] %v212
                %v214 = vld [vmem:[%s182 + $0x168] sm:%s175]
                %215 = vst [vmem:[%s183 + $0x78] sm:%s175] %v214
              $region75: #{tpu_custom_call.1} parent=69 // loop_footer
                %s181 = sadd.s32 1, %s177
              $region76: #{tpu_custom_call.1} parent=69 // loop_footer_branch
                %176 = sbr.rel target = $region72
              $region77: #{tpu_custom_call.1} parent=69 // loop_exit
                _
            $region70: #{tpu_custom_call.1} parent=61 // pred_fallthru
              _
          $region62: #{tpu_custom_call.1} parent=57 // pred_fallthru
            _
          %260 = vnop
        $region58: #{tpu_custom_call.1} parent=15 // pred_fallthru
          _
      $region16: #{tpu_custom_call.1} parent=5 // pred_fallthru
        _
      %p261 = scmp.le.s32.totalorder 1, %s8
      %p262 = scmp.lt.s32.totalorder %s8, 4
      %p263 = pnand %p261, %p262
      %p264 = pneg %p263
      // Predicated region
      $region93: #{tpu_custom_call.1} parent=5 // pred_check
        _
      $region94: #{tpu_custom_call.1} parent=5 // pred_check_branch
        %266 = sbr.rel (%p263) target = $region96
      $region95: #{tpu_custom_call.1} parent=5 // pred_region
        %s267 = ssub.s32 %s8, 1
        %s268 = sand.u32 %s21, 1
        %s269 = sand.u32 %s21, 1
        %s270 = smul.addr %s269, 32
        %s271 = scalar_lea.vmem [#allocation2], %s270
        // Predicated region
        $region97: #{tpu_custom_call.1} parent=95 // pred_check
          %p272 = pneg %p34
        $region98: #{tpu_custom_call.1} parent=95 // pred_check_branch
          %274 = sbr.rel (%p272) target = $region100
        $region99: #{tpu_custom_call.1} parent=95 // pred_region
          _
        $region100: #{tpu_custom_call.1} parent=95 // pred_fallthru
          _
        %s275 = sand.u32 %s47, 1
        %s276 = sand.u32 %s47, 1
        %s277 = smul.addr %s276, 128
        %s278 = scalar_lea.vmem [#allocation3], %s277
        // Predicated region
        $region101: #{tpu_custom_call.1} parent=95 // pred_check
          %p279 = pneg %p60
        $region102: #{tpu_custom_call.1} parent=95 // pred_check_branch
          %281 = sbr.rel (%p279) target = $region104
        $region103: #{tpu_custom_call.1} parent=95 // pred_region
          _
        $region104: #{tpu_custom_call.1} parent=95 // pred_fallthru
          _
        %s282 = sand.u32 %s21, 1
        %s283 = sand.u32 %s21, 1
        %s284 = smul.addr %s283, 32
        %s285 = scalar_lea.vmem [#allocation2], %s284
        %p286 = pneg %p34
        %p287 = pneg %p31
        %s288 = sand.u32 %s47, 1
        %s289 = sand.u32 %s47, 1
        %s290 = smul.addr %s289, 128
        %s291 = scalar_lea.vmem [#allocation3], %s290
        %p292 = pneg %p60
        %p293 = pneg %p57
        %p294 = pneg %p86
        %p295 = pneg %p83
        %s296 = sand.u32 %s73, 1
        %s297 = sand.u32 %s73, 1
        %s298 = smul.addr %s297, 128
        %s299 = scalar_lea.vmem [#allocation4], %s298
        %v300 = vld [vmem:[%s271] sm:$0xff]
        %v301 = vld [vmem:[%s271 + $0x8] sm:$0xff]
        %v302 = vld [vmem:[%s271 + $0x10] sm:$0xff]
        %v303 = vld [vmem:[%s271 + $0x18] sm:$0xff]
        %v304 = vmul.f32 %v300, 0.5
        %v305 = vmul.f32 %v301, 0.5
        %v306 = vmul.f32 %v302, 0.5
        %v307 = vmul.f32 %v303, 0.5
        %v308 = vadd.f32 %v304, 0.5
        %v309 = vadd.f32 %v305, 0.5
        %v310 = vadd.f32 %v306, 0.5
        %v311 = vadd.f32 %v307, 0.5
        %v312 = vround.ne.pseudo %v308
        %v313 = vround.ne.pseudo %v309
        %v314 = vround.ne.pseudo %v310
        %v315 = vround.ne.pseudo %v311
        %v316 = vmax.f32 %v312, 0.0
        %v317 = vmax.f32 %v313, 0.0
        %v318 = vmax.f32 %v314, 0.0
        %v319 = vmax.f32 %v315, 0.0
        %v320 = vmin.f32 %v316, 1.0
        %v321 = vmin.f32 %v317, 1.0
        %v322 = vmin.f32 %v318, 1.0
        %v323 = vmin.f32 %v319, 1.0
        %v324 = vadd.f32 %v320, %v321
        %v325 = vadd.f32 %v324, %v322
        %v326 = vadd.f32 %v325, %v323
        %vm327 = vcmp.eq.f32.partialorder %v326, 0.0
        %v328 = vsel %vm327, 1.0, %v326
        %v329 = vrcp.pop %v328
        %v330 = vmul.f32 %v328, %v329
        %v331 = vsub.f32 1.0, %v330
        %v332 = vmul.f32 %v329, %v331
        %v333 = vadd.f32 %v329, %v332
        %vm334 = vweird.f32 %v328
        %vm335 = vweird.f32 %v329
        %vm336 = vmor %vm334, %vm335
        %v337 = vsel %vm336, %v329, %v333
        %v338 = vand.u32 2147483647, %v328
        %vm339 = vcmp.eq.f32.partialorder %v338, 8.507059e+37
        %v340 = vand.u32 %v328, 2147483648
        %v341 = vor.u32 1.1754944e-38, %v340
        %v342 = vsel %vm339, %v341, %v337
        %v343 = vld [vmem:[%s278] sm:$0xff]
        %v344 = vld [vmem:[%s278 + $0x8] sm:$0xff]
        %v345 = vld [vmem:[%s278 + $0x10] sm:$0xff]
        %v346 = vld [vmem:[%s278 + $0x18] sm:$0xff]
        %v347 = vmul.f32 %v343, %v320
        %v348 = vmul.f32 %v344, %v321
        %v349 = vmul.f32 %v345, %v322
        %v350 = vmul.f32 %v346, %v323
        %v351 = vadd.f32 %v347, %v348
        %v352 = vadd.f32 %v351, %v349
        %v353 = vadd.f32 %v352, %v350
        %v354 = vmul.f32 %v353, %v342
        %v355 = vmul.f32 %v354, %v320
        %v356 = vmul.f32 %v354, %v321
        %v357 = vmul.f32 %v354, %v322
        %v358 = vmul.f32 %v354, %v323
        %359 = vst [vmem:[%s299] sm:$0xff] %v355
        %360 = vst [vmem:[%s299 + $0x8] sm:$0xff] %v356
        %361 = vst [vmem:[%s299 + $0x10] sm:$0xff] %v357
        %362 = vst [vmem:[%s299 + $0x18] sm:$0xff] %v358
        %s363 = scalar_lea.vmem %s278, 32 [#allocation3]
        %v364 = vld [vmem:[%s363] sm:$0xff]
        %v365 = vld [vmem:[%s363 + $0x8] sm:$0xff]
        %v366 = vld [vmem:[%s363 + $0x10] sm:$0xff]
        %v367 = vld [vmem:[%s363 + $0x18] sm:$0xff]
        %v368 = vmul.f32 %v364, %v320
        %v369 = vmul.f32 %v365, %v321
        %v370 = vmul.f32 %v366, %v322
        %v371 = vmul.f32 %v367, %v323
        %v372 = vadd.f32 %v368, %v369
        %v373 = vadd.f32 %v372, %v370
        %v374 = vadd.f32 %v373, %v371
        %v375 = vmul.f32 %v374, %v342
        %v376 = vmul.f32 %v375, %v320
        %v377 = vmul.f32 %v375, %v321
        %v378 = vmul.f32 %v375, %v322
        %v379 = vmul.f32 %v375, %v323
        %s380 = scalar_lea.vmem %s299, 32 [#allocation4]
        %381 = vst [vmem:[%s380] sm:$0xff] %v376
        %382 = vst [vmem:[%s380 + $0x8] sm:$0xff] %v377
        %383 = vst [vmem:[%s380 + $0x10] sm:$0xff] %v378
        %384 = vst [vmem:[%s380 + $0x18] sm:$0xff] %v379
        %s385 = scalar_lea.vmem %s278, 64 [#allocation3]
        %v386 = vld [vmem:[%s385] sm:$0xff]
        %v387 = vld [vmem:[%s385 + $0x8] sm:$0xff]
        %v388 = vld [vmem:[%s385 + $0x10] sm:$0xff]
        %v389 = vld [vmem:[%s385 + $0x18] sm:$0xff]
        %v390 = vmul.f32 %v386, %v320
        %v391 = vmul.f32 %v387, %v321
        %v392 = vmul.f32 %v388, %v322
        %v393 = vmul.f32 %v389, %v323
        %v394 = vadd.f32 %v390, %v391
        %v395 = vadd.f32 %v394, %v392
        %v396 = vadd.f32 %v395, %v393
        %v397 = vmul.f32 %v396, %v342
        %v398 = vmul.f32 %v397, %v320
        %v399 = vmul.f32 %v397, %v321
        %v400 = vmul.f32 %v397, %v322
        %v401 = vmul.f32 %v397, %v323
        %s402 = scalar_lea.vmem %s299, 64 [#allocation4]
        %403 = vst [vmem:[%s402] sm:$0xff] %v398
        %404 = vst [vmem:[%s402 + $0x8] sm:$0xff] %v399
        %405 = vst [vmem:[%s402 + $0x10] sm:$0xff] %v400
        %406 = vst [vmem:[%s402 + $0x18] sm:$0xff] %v401
        %s407 = scalar_lea.vmem %s278, 96 [#allocation3]
        %v408 = vld [vmem:[%s407] sm:$0xff]
        %v409 = vld [vmem:[%s407 + $0x8] sm:$0xff]
        %v410 = vld [vmem:[%s407 + $0x10] sm:$0xff]
        %v411 = vld [vmem:[%s407 + $0x18] sm:$0xff]
        %v412 = vmul.f32 %v408, %v320
        %v413 = vmul.f32 %v409, %v321
        %v414 = vmul.f32 %v410, %v322
        %v415 = vmul.f32 %v411, %v323
        %v416 = vadd.f32 %v412, %v413
        %v417 = vadd.f32 %v416, %v414
        %v418 = vadd.f32 %v417, %v415
        %v419 = vmul.f32 %v418, %v342
        %v420 = vmul.f32 %v419, %v320
        %v421 = vmul.f32 %v419, %v321
        %v422 = vmul.f32 %v419, %v322
        %v423 = vmul.f32 %v419, %v323
        %s424 = scalar_lea.vmem %s299, 96 [#allocation4]
        %425 = vst [vmem:[%s424] sm:$0xff] %v420
        %426 = vst [vmem:[%s424 + $0x8] sm:$0xff] %v421
        %427 = vst [vmem:[%s424 + $0x10] sm:$0xff] %v422
        %428 = vst [vmem:[%s424 + $0x18] sm:$0xff] %v423
        %s429 = sand.u32 %s73, 1
        %s430 = sand.u32 %s73, 1
        %s431 = smul.addr %s430, 128
        %s432 = scalar_lea.vmem [#allocation4], %s431
        // Predicated region
        $region105: #{tpu_custom_call.1} parent=95 // pred_check
          %p433 = pneg %p83
        $region106: #{tpu_custom_call.1} parent=95 // pred_check_branch
          %435 = sbr.rel (%p433) target = $region108
        $region107: #{tpu_custom_call.1} parent=95 // pred_region
          %s436 = smul.addr %s13, 8
          %s437 = scalar_lea.vmem %s2, %s436
          // Predicated region
          $region109: #{tpu_custom_call.1} parent=107 // pred_check
            _
          $region110: #{tpu_custom_call.1} parent=107 // pred_check_branch
            %439 = sbr.rel (0) target = $region112
          $region111: #{tpu_custom_call.1} parent=107 // pred_region
            // Predicated region
            $region113: #{tpu_custom_call.1} parent=111 // pred_check
              _
            $region114: #{tpu_custom_call.1} parent=111 // pred_check_branch
              %441 = sbr.rel (0) target = $region116
            $region115: #{tpu_custom_call.1} parent=111 // pred_region
              // Predicated region
              $region128: #{tpu_custom_call.1} parent=115 // pred_check
                _
              $region129: #{tpu_custom_call.1} parent=115 // pred_check_branch
                %487 = sbr.rel (0) target = $region131
              $region130: #{tpu_custom_call.1} parent=115 // pred_region
                loop: start=0, step=1, limit=1
                $region132: #{tpu_custom_call.1} parent=130 // loop_pre_header
                  _
                $region133: #{tpu_custom_call.1} parent=130 // loop_header
                  %s489 = sphi 0, %s493
                  %p490 = scmp.ge.s32.totalorder %s489, 1
                  %s494 = sphi %s432, %s432
                  %s495 = sphi %s437, %s437
                $region134: #{tpu_custom_call.1} parent=130 // loop_header_branch
                  %492 = sbr.rel (%p490) target = $region138
                $region135: #{tpu_custom_call.1} parent=130 // loop_body
                  %v496 = vld [vmem:[%s494] sm:$0xff]
                  %497 = vst [vmem:[%s495] sm:$0xff] %v496
                  %v498 = vld [vmem:[%s494 + $0x8] sm:$0xff]
                  %499 = vst [vmem:[%s495 + $0x18] sm:$0xff] %v498
                  %v500 = vld [vmem:[%s494 + $0x10] sm:$0xff]
                  %501 = vst [vmem:[%s495 + $0x30] sm:$0xff] %v500
                  %v502 = vld [vmem:[%s494 + $0x18] sm:$0xff]
                  %503 = vst [vmem:[%s495 + $0x48] sm:$0xff] %v502
                  %v504 = vld [vmem:[%s494 + $0x20] sm:$0xff]
                  %505 = vst [vmem:[%s495 + $0x60] sm:$0xff] %v504
                  %v506 = vld [vmem:[%s494 + $0x28] sm:$0xff]
                  %507 = vst [vmem:[%s495 + $0x78] sm:$0xff] %v506
                  %v508 = vld [vmem:[%s494 + $0x30] sm:$0xff]
                  %509 = vst [vmem:[%s495 + $0x90] sm:$0xff] %v508
                  %v510 = vld [vmem:[%s494 + $0x38] sm:$0xff]
                  %511 = vst [vmem:[%s495 + $0xa8] sm:$0xff] %v510
                  %v512 = vld [vmem:[%s494 + $0x40] sm:$0xff]
                  %513 = vst [vmem:[%s495 + $0xc0] sm:$0xff] %v512
                  %v514 = vld [vmem:[%s494 + $0x48] sm:$0xff]
                  %515 = vst [vmem:[%s495 + $0xd8] sm:$0xff] %v514
                  %v516 = vld [vmem:[%s494 + $0x50] sm:$0xff]
                  %517 = vst [vmem:[%s495 + $0xf0] sm:$0xff] %v516
                  %v518 = vld [vmem:[%s494 + $0x58] sm:$0xff]
                  %519 = vst [vmem:[%s495 + $0x108] sm:$0xff] %v518
                  %v520 = vld [vmem:[%s494 + $0x60] sm:$0xff]
                  %521 = vst [vmem:[%s495 + $0x120] sm:$0xff] %v520
                  %v522 = vld [vmem:[%s494 + $0x68] sm:$0xff]
                  %523 = vst [vmem:[%s495 + $0x138] sm:$0xff] %v522
                  %v524 = vld [vmem:[%s494 + $0x70] sm:$0xff]
                  %525 = vst [vmem:[%s495 + $0x150] sm:$0xff] %v524
                  %v526 = vld [vmem:[%s494 + $0x78] sm:$0xff]
                  %527 = vst [vmem:[%s495 + $0x168] sm:$0xff] %v526
                $region136: #{tpu_custom_call.1} parent=130 // loop_footer
                  %s493 = sadd.s32 1, %s489
                $region137: #{tpu_custom_call.1} parent=130 // loop_footer_branch
                  %488 = sbr.rel target = $region133
                $region138: #{tpu_custom_call.1} parent=130 // loop_exit
                  _
              $region131: #{tpu_custom_call.1} parent=115 // pred_fallthru
                _
              // Predicated region
              $region139: #{tpu_custom_call.1} parent=115 // pred_check
                _
              $region140: #{tpu_custom_call.1} parent=115 // pred_check_branch
                %529 = sbr.rel target = $region142
              $region141: #{tpu_custom_call.1} parent=115 // pred_region
                _
              $region142: #{tpu_custom_call.1} parent=115 // pred_fallthru
                _
            $region116: #{tpu_custom_call.1} parent=111 // pred_fallthru
              _
            // Predicated region
            $region117: #{tpu_custom_call.1} parent=111 // pred_check
              _
            $region118: #{tpu_custom_call.1} parent=111 // pred_check_branch
              %443 = sbr.rel target = $region120
            $region119: #{tpu_custom_call.1} parent=111 // pred_region
              %s445 = ssub.s32 256, 1
              loop: start=0, step=1, limit=1
              $region121: #{tpu_custom_call.1} parent=119 // loop_pre_header
                _
              $region122: #{tpu_custom_call.1} parent=119 // loop_header
                %s447 = sphi 0, %s451
                %p448 = scmp.ge.s32.totalorder %s447, 1
                %s452 = sphi %s432, %s432
                %s453 = sphi %s437, %s437
              $region123: #{tpu_custom_call.1} parent=119 // loop_header_branch
                %450 = sbr.rel (%p448) target = $region127
              $region124: #{tpu_custom_call.1} parent=119 // loop_body
                %v454 = vld [vmem:[%s452] sm:%s445]
                %455 = vst [vmem:[%s453] sm:%s445] %v454
                %v456 = vld [vmem:[%s452 + $0x8] sm:%s445]
                %457 = vst [vmem:[%s453 + $0x18] sm:%s445] %v456
                %v458 = vld [vmem:[%s452 + $0x10] sm:%s445]
                %459 = vst [vmem:[%s453 + $0x30] sm:%s445] %v458
                %v460 = vld [vmem:[%s452 + $0x18] sm:%s445]
                %461 = vst [vmem:[%s453 + $0x48] sm:%s445] %v460
                %v462 = vld [vmem:[%s452 + $0x20] sm:%s445]
                %463 = vst [vmem:[%s453 + $0x60] sm:%s445] %v462
                %v464 = vld [vmem:[%s452 + $0x28] sm:%s445]
                %465 = vst [vmem:[%s453 + $0x78] sm:%s445] %v464
                %v466 = vld [vmem:[%s452 + $0x30] sm:%s445]
                %467 = vst [vmem:[%s453 + $0x90] sm:%s445] %v466
                %v468 = vld [vmem:[%s452 + $0x38] sm:%s445]
                %469 = vst [vmem:[%s453 + $0xa8] sm:%s445] %v468
                %v470 = vld [vmem:[%s452 + $0x40] sm:%s445]
                %471 = vst [vmem:[%s453 + $0xc0] sm:%s445] %v470
                %v472 = vld [vmem:[%s452 + $0x48] sm:%s445]
                %473 = vst [vmem:[%s453 + $0xd8] sm:%s445] %v472
                %v474 = vld [vmem:[%s452 + $0x50] sm:%s445]
                %475 = vst [vmem:[%s453 + $0xf0] sm:%s445] %v474
                %v476 = vld [vmem:[%s452 + $0x58] sm:%s445]
                %477 = vst [vmem:[%s453 + $0x108] sm:%s445] %v476
                %v478 = vld [vmem:[%s452 + $0x60] sm:%s445]
                %479 = vst [vmem:[%s453 + $0x120] sm:%s445] %v478
                %v480 = vld [vmem:[%s452 + $0x68] sm:%s445]
                %481 = vst [vmem:[%s453 + $0x138] sm:%s445] %v480
                %v482 = vld [vmem:[%s452 + $0x70] sm:%s445]
                %483 = vst [vmem:[%s453 + $0x150] sm:%s445] %v482
                %v484 = vld [vmem:[%s452 + $0x78] sm:%s445]
                %485 = vst [vmem:[%s453 + $0x168] sm:%s445] %v484
              $region125: #{tpu_custom_call.1} parent=119 // loop_footer
                %s451 = sadd.s32 1, %s447
              $region126: #{tpu_custom_call.1} parent=119 // loop_footer_branch
                %446 = sbr.rel target = $region122
              $region127: #{tpu_custom_call.1} parent=119 // loop_exit
                _
            $region120: #{tpu_custom_call.1} parent=111 // pred_fallthru
              _
          $region112: #{tpu_custom_call.1} parent=107 // pred_fallthru
            _
          %530 = vnop
        $region108: #{tpu_custom_call.1} parent=95 // pred_fallthru
          _
      $region96: #{tpu_custom_call.1} parent=5 // pred_fallthru
        _
      %p531 = scmp.le.s32.totalorder 2, %s8
      // Predicated region
      $region143: #{tpu_custom_call.1} parent=5 // pred_check
        %p532 = pneg %p531
      $region144: #{tpu_custom_call.1} parent=5 // pred_check_branch
        %534 = sbr.rel (%p532) target = $region146
      $region145: #{tpu_custom_call.1} parent=5 // pred_region
        %s535 = ssub.s32 %s8, 2
        // Predicated region
        $region147: #{tpu_custom_call.1} parent=145 // pred_check
          %p536 = pneg %p89
        $region148: #{tpu_custom_call.1} parent=145 // pred_check_branch
          %538 = sbr.rel (%p536) target = $region150
        $region149: #{tpu_custom_call.1} parent=145 // pred_region
          %s539 = sand.u32 %s74, 1
          %s540 = sand.u32 %s74, 1
          %s541 = smul.addr %s540, 128
          %s542 = scalar_lea.vmem [#allocation4], %s541
        $region150: #{tpu_custom_call.1} parent=145 // pred_fallthru
          _
      $region146: #{tpu_custom_call.1} parent=5 // pred_fallthru
        _
    $region6: #{tpu_custom_call.1} parent=1 // loop_footer
      %s12 = sadd.s32 1, %s8
    $region7: #{tpu_custom_call.1} parent=1 // loop_footer_branch
      %7 = sbr.rel target = $region3
    $region8: #{tpu_custom_call.1} parent=1 // loop_exit
      _

</llo_original>
